<compile_context>
chip_gen: v7x
topology: tpu7x:2x2x1
jax: 0.10.0
libtpu: 0.0.40
codegen_flags: <defaults>
</compile_context>

<pallas_src>
import jax
import jax.numpy as jnp
from jax.experimental import pallas as pl
from jax.experimental.pallas import tpu as pltpu

_EPS = 1e-12  # matches torch.nn.functional.normalize default


def _round_up(n: int, m: int) -> int:
    return ((n + m - 1) // m) * m


def _l2norm_kernel(x_ref, o_ref):
    # x_ref / o_ref: (TILE_B, D) tile in VMEM
    x = x_ref[...].astype(jnp.float32)
    ss = jnp.sum(x * x, axis=-1, keepdims=True)            # (TILE_B, 1)
    # max(||x||, eps) semantics == clamp sum-of-squares at eps^2 (sqrt monotone),
    # then a single rsqrt (EUP) + broadcast multiply (VPU).
    inv = jax.lax.rsqrt(jnp.maximum(ss, _EPS * _EPS))
    o_ref[...] = (x * inv).astype(o_ref.dtype)


def l2_normalize(x: jax.Array, tile_b: int | None = None) -> jax.Array:
    """L2-normalize along dim=1 of a (B, D) array using a Pallas TPU kernel."""
    assert x.ndim == 2, "kernel expects (batch, features); reshape in the wrapper"
    B, D = x.shape
    itemsize = jnp.dtype(x.dtype).itemsize
    # Minimum sublane multiple per dtype packing (f32: 8, bf16: 16, 8-bit: 32).
    sublane = {4: 8, 2: 16, 1: 32}.get(itemsize, 8)

    if tile_b is None:
        # VMEM per grid step ~= 2 buffers x (in + out) x tile_b x D x itemsize.
        # Budget 8 MiB -> safe on v5e's 16 MiB scoped default and v7x's 64 MiB
        # physical VMEM, while giving multi-MiB blocks (>= ~85% of HBM roofline).
        budget_bytes = 8 * 1024 * 1024
        cap = max(sublane, (budget_bytes // (4 * D * itemsize)) // sublane * sublane)
        # Prefer at least 2 grid steps when the batch allows it, so the
        # "parallel" batch axis can be sharded across both v7x TensorCores.
        want = _round_up(max(1, (B + 1) // 2), sublane)
        tile_b = max(sublane, min(cap, want))
    else:
        tile_b = max(sublane, _round_up(tile_b, sublane))

    # Remainder handling: zero-pad the batch instead of asserting divisibility.
    # Padded rows have ss == 0 -> clamped to eps^2 -> output rows are exactly 0,
    # and they are sliced off below.
    B_pad = _round_up(B, tile_b)
    x_in = x if B_pad == B else jnp.pad(x, ((0, B_pad - B), (0, 0)))

    grid = (B_pad // tile_b,)
    cost = pl.CostEstimate(
        flops=3 * B_pad * D,
        transcendentals=B_pad,
        bytes_accessed=2 * B_pad * D * itemsize,
    )

    out = pl.pallas_call(
        _l2norm_kernel,
        out_shape=jax.ShapeDtypeStruct((B_pad, D), x.dtype),
        grid_spec=pltpu.PrefetchScalarGridSpec(
            num_scalar_prefetch=0,
            grid=grid,
            # Full feature dim stays in the block (lane-dense, reduction needs it);
            # tile only over batch.
            in_specs=[pl.BlockSpec((tile_b, D), lambda i: (i, 0))],
            out_specs=pl.BlockSpec((tile_b, D), lambda i: (i, 0)),
        ),
        compiler_params=pltpu.CompilerParams(
            dimension_semantics=("parallel",),
        ),
        cost_estimate=cost,
    )(x_in)

    return out if B_pad == B else out[:B]


def _reference(x):
    x32 = x.astype(jnp.float32)
    norm = jnp.sqrt(jnp.sum(x32 * x32, axis=1, keepdims=True))
    return (x32 / jnp.maximum(norm, _EPS)).astype(x.dtype)


if __name__ == "__main__":
    key = jax.random.PRNGKey(0)

    # Small shape consistent with the module: batch of descriptors, feature dim 256.
    B, D = 8, 256
    x = jax.random.normal(key, (B, D), dtype=jnp.float32)
    out = jax.block_until_ready(l2_normalize(x))
    ref = _reference(x)
    assert jnp.allclose(out, ref, atol=1e-5, rtol=1e-5), "mismatch vs reference"
    assert jnp.allclose(jnp.linalg.norm(out, axis=1), 1.0, atol=1e-4)

    # Ragged batch (exercises the padding / cdiv-grid path).
    B2 = 10
    x2 = jax.random.normal(jax.random.PRNGKey(1), (B2, D), dtype=jnp.float32)
    out2 = jax.block_until_ready(l2_normalize(x2))
    ref2 = _reference(x2)
    assert out2.shape == (B2, D)
    assert jnp.allclose(out2, ref2, atol=1e-5, rtol=1e-5), "mismatch vs reference (ragged)"

    print("KERNEL_OK")
</pallas_src>

<mosaic_0001>
module attributes {stable_mosaic.version = 11 : i64} {
  func.func @_l2norm_kernel(%arg0: i32, %arg1: memref<8x256xf32, #tpu.memory_space<vmem>>, %arg2: memref<8x256xf32, #tpu.memory_space<vmem>>) attributes {dimension_semantics = [#tpu.dimension_semantics<parallel>], iteration_bounds = array<i64: 1>, scalar_prefetch = 0 : i64, scratch_operands = 0 : i64, tpu.core_type = #tpu.core_type<tc>, window_params = [{transform_indices = @transform_0, window_bounds = array<i64: 8, 256>}, {transform_indices = @transform_1, window_bounds = array<i64: 8, 256>}]} {
    %c0 = arith.constant 0 : index
    %c0_0 = arith.constant 0 : index
    %0 = vector.load %arg1[%c0, %c0_0] : memref<8x256xf32, #tpu.memory_space<vmem>>, vector<8x256xf32>
    %1 = arith.mulf %0, %0 : vector<8x256xf32>
    %cst = arith.constant dense<0.000000e+00> : vector<8xf32>
    %2 = vector.multi_reduction <add>, %1, %cst [1] : vector<8x256xf32> to vector<8xf32>
    %3 = vector.shape_cast %2 : vector<8xf32> to vector<8x1xf32>
    %cst_1 = arith.constant 1.000000e-24 : f32
    %4 = vector.broadcast %cst_1 : f32 to vector<8x1xf32>
    %5 = arith.maximumf %3, %4 : vector<8x1xf32>
    %6 = math.rsqrt %5 : vector<8x1xf32>
    %7 = vector.broadcast %6 : vector<8x1xf32> to vector<8x256xf32>
    %8 = arith.mulf %0, %7 : vector<8x256xf32>
    %c0_2 = arith.constant 0 : index
    %c0_3 = arith.constant 0 : index
    %9 = vector.load %arg2[%c0_2, %c0_3] : memref<8x256xf32, #tpu.memory_space<vmem>>, vector<8x256xf32>
    tpu.vector_store %arg2[%c0_2, %c0_3], %8 {strides = array<i32>} : memref<8x256xf32, #tpu.memory_space<vmem>>, vector<8x256xf32>,
    return
  }
  func.func @transform_0(%arg0: i32) -> (i32, i32) {
    %c0_i32 = arith.constant 0 : i32
    %c0_i32_0 = arith.constant 0 : i32
    return %arg0, %c0_i32 : i32, i32
  }
  func.func @transform_1(%arg0: i32) -> (i32, i32) {
    %c0_i32 = arith.constant 0 : i32
    %c0_i32_0 = arith.constant 0 : i32
    return %arg0, %c0_i32 : i32, i32
  }
}

</mosaic_0001>

<llo_original>
// kernel: tpu_custom_call.1
$region0: #{tpu_custom_call.1}
  #allocation0 [shape = 'u32[]', space=smem, size = 0x4, offset = 0x4, fixed_abs, tag = 'smem constant byte address 0x4 - core index']
  #allocation1 [shape = 'u32[144,128]{1,0:T(1,128)}', space=vmem, size = 0x12000, scoped, tag = 'internal scratch']
  %s0 = inlined_call_operand.hbm [shape: f32[8,256], index: 0, kind: input, shape index: {}]
  %s1 = inlined_call_operand.hbm [shape: f32[8,256], index: 1, kind: output, shape index: {}]
  %s2 = sld [smem:[#allocation0]]
  $region18: #{tpu_custom_call.1} parent=0
    _
  %s4 = ssub.s32 1, %s2
  %s5 = scalar_select 0, %s4, %s2
  $region1: #{tpu_custom_call.1} parent=0
    #allocation2 [shape = 'u8[8192]{0}', space=vmem, size = 0x2000, scoped, tag = 'input window, operand 0, single buffered']
    #allocation3 [shape = 's32[1]{0}', space=sflag, size = 0x4, scoped, tag = 'scoped memory for tpu_custom_call.1']
    #allocation4 [shape = 's32[1]{0}', space=sflag, size = 0x4, scoped, tag = 'scoped memory for tpu_custom_call.1']
    #allocation5 [shape = 'u8[8192]{0}', space=vmem, size = 0x2000, scoped, tag = 'output window, operand 0, single buffered']
    %6 = vsyncpa [#allocation3], 0
    %7 = vsyncpa [#allocation4], 0
    // Predicated region
    $region2: #{tpu_custom_call.1} parent=1 // pred_check
      _
    $region3: #{tpu_custom_call.1} parent=1 // pred_check_branch
      %9 = sbr.rel (0) target = $region5
    $region4: #{tpu_custom_call.1} parent=1 // pred_region
      %s11 = ssub.s32 256, 256
      %12 = vsyncadd [#allocation3], %s11
      %s14 = sshll.u32 [#allocation2], 4
      %s15 = int_to_ptr.vmem [resolvable:$true] %s14
      %17 = dma.hbm_to_vmem [thread:$0]  %s0, 256, %s15, [#allocation3]
    $region5: #{tpu_custom_call.1} parent=1 // pred_fallthru
      _
    // Predicated region
    $region6: #{tpu_custom_call.1} parent=1 // pred_check
      _
    $region7: #{tpu_custom_call.1} parent=1 // pred_check_branch
      %19 = sbr.rel (0) target = $region9
    $region8: #{tpu_custom_call.1} parent=1 // pred_region
      %20 = dma.done [#allocation3], 256
    $region9: #{tpu_custom_call.1} parent=1 // pred_fallthru
      _
    %v21 = vld [vmem:[#allocation2] sm:$0xff]
    %v22 = vld [vmem:[#allocation2 + $0x8] sm:$0xff]
    %v23 = vmul.f32 %v21, %v21
    %v24 = vmul.f32 %v22, %v22
    %v25 = vadd.f32 %v23, %v24
    %26 = vadd.xlane.f32.xlu0 %v25
    %v27 = vpop.xlane.xlu0 %26
    %v28 = vmax.f32 %v27, 1e-24
    %v29 = vrsqrt.pop %v28
    %v30 = vmul.f32 %v21, %v29
    %v31 = vmul.f32 %v22, %v29
    %32 = vst [vmem:[#allocation5] sm:$0xff] %v30
    %33 = vst [vmem:[#allocation5 + $0x8] sm:$0xff] %v31
    // Predicated region
    $region10: #{tpu_custom_call.1} parent=1 // pred_check
      _
    $region11: #{tpu_custom_call.1} parent=1 // pred_check_branch
      %35 = sbr.rel (0) target = $region13
    $region12: #{tpu_custom_call.1} parent=1 // pred_region
      %s37 = ssub.s32 256, 256
      %38 = vsyncadd [#allocation4], %s37
      %s40 = sshll.u32 [#allocation5], 4
      %s41 = int_to_ptr.vmem [resolvable:$true] %s40
      %43 = dma.vmem_to_hbm [thread:$0]  %s41, 256, %s1, [#allocation4]
    $region13: #{tpu_custom_call.1} parent=1 // pred_fallthru
      _
    // Predicated region
    $region14: #{tpu_custom_call.1} parent=1 // pred_check
      _
    $region15: #{tpu_custom_call.1} parent=1 // pred_check_branch
      %45 = sbr.rel (0) target = $region17
    $region16: #{tpu_custom_call.1} parent=1 // pred_region
      %46 = dma.done [#allocation4], 256
    $region17: #{tpu_custom_call.1} parent=1 // pred_fallthru
      _
    %47 = vsyncpa [#allocation3], 1
    %48 = vsyncpa [#allocation4], 1

</llo_original>
